<compile_context>
chip_gen: v5e
topology: v5e:2x2
jax: 0.10.0
libtpu: 0.0.40
codegen_flags: <defaults>
</compile_context>

<pallas_src>
import jax
import jax.numpy as jnp
from jax.experimental import pallas as pl
from jax.experimental.pallas import tpu as pltpu


_NEG_SLOPE = 0.01   # F.leaky_relu default negative_slope
_LANE = 128


def _leaky_relu(x):
    return jnp.where(x >= 0, x, _NEG_SLOPE * x)


def _dueling_dqn_kernel(x_ref, w1_ref, w_ref, b_ref, q_ref):
    """x_ref: (B, S) f32; w1_ref: (S, 128) bf16; w_ref: (3, 128, 128) bf16
    (rows = w2, w_heads, w_out_folded); b_ref: (4, 128) f32; q_ref: (B, 128) f32."""
    x = x_ref[...]
    b = b_ref[...]                       # (4, 128) f32, one vreg

    # trunk: fc1 -> leaky_relu -> fc2 -> leaky_relu (bf16 MXU, f32 accumulate/VPU)
    h1 = _leaky_relu(
        jnp.dot(x.astype(jnp.bfloat16), w1_ref[...],
                preferred_element_type=jnp.float32) + b[0:1, :])
    h2 = _leaky_relu(
        jnp.dot(h1.astype(jnp.bfloat16), w_ref[0],
                preferred_element_type=jnp.float32) + b[1:2, :])

    # fused heads: cols [0:n3] = value hidden, [n3:2*n3] = advantage hidden, rest 0
    hh = _leaky_relu(
        jnp.dot(h2.astype(jnp.bfloat16), w_ref[1],
                preferred_element_type=jnp.float32) + b[2:3, :])

    # folded output: cols 0..A-1 already hold Q = V + A - mean(A); pad cols are 0.
    q_ref[...] = (
        jnp.dot(hh.astype(jnp.bfloat16), w_ref[2],
                preferred_element_type=jnp.float32) + b[3:4, :])


def pack_params(params, *, weight_dtype=jnp.bfloat16):
    """Fuse, fold the dueling combine, lane-pad, and stack the weights/biases."""
    s = params["w1"].shape[0]
    n1 = params["w1"].shape[1]        # number_of_nodes[0]
    n2 = params["w2"].shape[1]        # number_of_nodes[1]
    n3 = params["whv"].shape[1]       # number_of_nodes[2]
    a = params["wza"].shape[1]        # action_shape
    assert n1 <= _LANE and n2 <= _LANE and 2 * n3 <= _LANE and a <= _LANE, \
        "pack_params: this fused layout assumes hidden widths <= 128"

    f32 = jnp.float32

    # trunk weights, lane-padded to 128 output columns (pad cols stay exactly 0)
    w1 = jnp.zeros((s, _LANE), f32).at[:, :n1].set(params["w1"])
    w2 = jnp.zeros((_LANE, _LANE), f32).at[:n1, :n2].set(params["w2"])

    # fused [value | advantage] hidden layer
    w_heads = jnp.zeros((_LANE, _LANE), f32)
    w_heads = w_heads.at[:n2, :n3].set(params["whv"])
    w_heads = w_heads.at[:n2, n3:2 * n3].set(params["wha"])

    # fused output layer with the dueling combine folded in:
    #   Q_j = hv @ Wzv + ha @ (Wza[:,j] - mean_k Wza[:,k]) + bzv + bza_j - mean(bza)
    wza_centered = params["wza"] - jnp.mean(params["wza"], axis=1, keepdims=True)
    w_out = jnp.zeros((_LANE, _LANE), f32)
    w_out = w_out.at[:n3, :a].set(jnp.broadcast_to(params["wzv"], (n3, a)))
    w_out = w_out.at[n3:2 * n3, :a].set(wza_centered)

    # bias stack (rows: b1, b2, b_heads, b_out_folded), stays f32
    b_stack = jnp.zeros((4, _LANE), f32)
    b_stack = b_stack.at[0, :n1].set(params["b1"][0])
    b_stack = b_stack.at[1, :n2].set(params["b2"][0])
    b_stack = b_stack.at[2, :n3].set(params["bhv"][0])
    b_stack = b_stack.at[2, n3:2 * n3].set(params["bha"][0])
    b_out = params["bzv"][0, 0] + params["bza"][0] - jnp.mean(params["bza"][0])
    b_stack = b_stack.at[3, :a].set(b_out)

    return {
        "w1": w1.astype(weight_dtype),
        "w_stack": jnp.stack([w2, w_heads, w_out]).astype(weight_dtype),
        "b_stack": b_stack,
        "action_shape": a,
    }


def dueling_dqn_forward_padded(x, packed, *, batch_tile=None):
    """Returns the lane-dense (batch, 128) Q slab; Q-values are cols 0..A-1."""
    batch, state_shape = x.shape
    operands = (x, packed["w1"], packed["w_stack"], packed["b_stack"])
    out_shape = jax.ShapeDtypeStruct((batch, _LANE), jnp.float32)

    use_grid = (
        batch_tile is not None
        and batch_tile % 8 == 0
        and batch % batch_tile == 0
        and batch > batch_tile
    )

    if use_grid:
        # Large-batch path: tile the batch, weights stay resident (constant
        # index map).  "parallel" shards across TensorCores on v7x and lets
        # the x/q DMAs pipeline with compute on all generations.
        return pl.pallas_call(
            _dueling_dqn_kernel,
            out_shape=out_shape,
            grid=(batch // batch_tile,),
            in_specs=[
                pl.BlockSpec((batch_tile, state_shape), lambda i: (i, 0)),
                pl.BlockSpec(packed["w1"].shape, lambda i: (0, 0)),
                pl.BlockSpec(packed["w_stack"].shape, lambda i: (0, 0, 0)),
                pl.BlockSpec(packed["b_stack"].shape, lambda i: (0, 0)),
            ],
            out_specs=pl.BlockSpec((batch_tile, _LANE), lambda i: (i, 0)),
            compiler_params=pltpu.CompilerParams(
                dimension_semantics=("parallel",)),
        )(*operands)

    # Tiny-batch path: gridless, everything in VMEM, no pipeline bookkeeping.
    return pl.pallas_call(
        _dueling_dqn_kernel,
        out_shape=out_shape,
        in_specs=[pl.BlockSpec(memory_space=pltpu.MemorySpace.VMEM)
                  for _ in operands],
        out_specs=pl.BlockSpec(memory_space=pltpu.MemorySpace.VMEM),
    )(*operands)


def dueling_dqn_forward(x, packed, *, batch_tile=None):
    """(batch, action_shape) Q-values.  Consumers that can index the lane-dense
    slab directly (e.g. in-kernel argmax) should use dueling_dqn_forward_padded."""
    a = packed["action_shape"]
    return dueling_dqn_forward_padded(x, packed, batch_tile=batch_tile)[:, :a]


def init_params(key, state_shape, action_shape, number_of_nodes):
    """PyTorch-style Linear init (U(-1/sqrt(fan_in), +1/sqrt(fan_in))).

    Weights stored transposed: (in_features, out_features); biases (1, out)."""
    dims = [
        ("w1", "b1", state_shape, number_of_nodes[0]),
        ("w2", "b2", number_of_nodes[0], number_of_nodes[1]),
        ("whv", "bhv", number_of_nodes[1], number_of_nodes[2]),
        ("wha", "bha", number_of_nodes[1], number_of_nodes[2]),
        ("wzv", "bzv", number_of_nodes[2], 1),
        ("wza", "bza", number_of_nodes[2], action_shape),
    ]
    params = {}
    for wname, bname, fan_in, fan_out in dims:
        key, kw, kb = jax.random.split(key, 3)
        bound = 1.0 / jnp.sqrt(jnp.float32(fan_in))
        params[wname] = jax.random.uniform(
            kw, (fan_in, fan_out), jnp.float32, -bound, bound)
        params[bname] = jax.random.uniform(
            kb, (1, fan_out), jnp.float32, -bound, bound)
    return params


def reference_forward(x, params):
    """Plain-JAX f32 reference (unfused), matching the PyTorch module."""
    h1 = _leaky_relu(x @ params["w1"] + params["b1"])
    h2 = _leaky_relu(h1 @ params["w2"] + params["b2"])
    value = _leaky_relu(h2 @ params["whv"] + params["bhv"]) @ params["wzv"] + params["bzv"]
    adv = _leaky_relu(h2 @ params["wha"] + params["bha"]) @ params["wza"] + params["bza"]
    return value + adv - adv.mean(axis=1, keepdims=True)


if __name__ == "__main__":
    # Module-consistent small shapes:
    #   3 taxis * 3 + 3 passengers * 4 = 21 features per flattened state.
    state_shape = 21
    action_shape = 7
    number_of_nodes = (64, 64, 32)

    key = jax.random.PRNGKey(0)
    params = init_params(key, state_shape, action_shape, number_of_nodes)
    packed = pack_params(params)

    # bf16 MXU operands with f32 accumulation -> tolerance relaxed vs f32 ref.
    ATOL = RTOL = 5e-2

    # 1) Tiny batch: gridless path.
    key, kx = jax.random.split(key)
    x_small = jax.random.uniform(kx, (8, state_shape), jnp.float32, 0.0, 5.0)
    q_small = jax.block_until_ready(dueling_dqn_forward(x_small, packed))
    q_small_ref = reference_forward(x_small, params)
    assert q_small.shape == (8, action_shape)
    assert jnp.allclose(q_small, q_small_ref, atol=ATOL, rtol=RTOL), (
        "gridless mismatch, max err "
        f"{float(jnp.max(jnp.abs(q_small - q_small_ref)))}")

    # 2) Larger batch: batch-tiled grid path (parallel semantics, 2 steps).
    key, kx = jax.random.split(key)
    x_big = jax.random.uniform(kx, (512, state_shape), jnp.float32, 0.0, 5.0)
    q_big = jax.block_until_ready(
        dueling_dqn_forward(x_big, packed, batch_tile=256))
    q_big_ref = reference_forward(x_big, params)
    assert q_big.shape == (512, action_shape)
    assert jnp.allclose(q_big, q_big_ref, atol=ATOL, rtol=RTOL), (
        "grid mismatch, max err "
        f"{float(jnp.max(jnp.abs(q_big - q_big_ref)))}")

    print("KERNEL_OK")
</pallas_src>

<mosaic_0001>
module attributes {stable_mosaic.version = 11 : i64} {
  func.func @_dueling_dqn_kernel(%arg0: memref<8x21xf32, #tpu.memory_space<vmem>>, %arg1: memref<21x128xbf16, #tpu.memory_space<vmem>>, %arg2: memref<3x128x128xbf16, #tpu.memory_space<vmem>>, %arg3: memref<4x128xf32, #tpu.memory_space<vmem>>, %arg4: memref<8x128xf32, #tpu.memory_space<vmem>>) attributes {dimension_semantics = [], scalar_prefetch = 0 : i64, scratch_operands = 0 : i64, tpu.core_type = #tpu.core_type<tc>} {
    %c0 = arith.constant 0 : index
    %c0_0 = arith.constant 0 : index
    %0 = vector.load %arg0[%c0, %c0_0] : memref<8x21xf32, #tpu.memory_space<vmem>>, vector<8x21xf32>
    %c0_1 = arith.constant 0 : index
    %c0_2 = arith.constant 0 : index
    %1 = vector.load %arg3[%c0_1, %c0_2] : memref<4x128xf32, #tpu.memory_space<vmem>>, vector<4x128xf32>
    %2 = arith.truncf %0 : vector<8x21xf32> to vector<8x21xbf16>
    %c0_3 = arith.constant 0 : index
    %c0_4 = arith.constant 0 : index
    %3 = vector.load %arg1[%c0_3, %c0_4] : memref<21x128xbf16, #tpu.memory_space<vmem>>, vector<21x128xbf16>
    %cst = arith.constant dense<0.000000e+00> : vector<8x128xf32>
    %4 = tpu.matmul %2, %3, %cst {dimension_numbers = #tpu.dot_dimension_numbers<[1], [0], [0], [1], [0, 0, 1, 1], [], []>} : vector<8x21xbf16>, vector<21x128xbf16>, vector<8x128xf32> -> vector<8x128xf32>
    %5 = vector.extract_strided_slice %1 {offsets = [0, 0], sizes = [1, 128], strides = [1, 1]} : vector<4x128xf32> to vector<1x128xf32>
    %6 = vector.broadcast %5 : vector<1x128xf32> to vector<8x128xf32>
    %7 = arith.addf %4, %6 : vector<8x128xf32>
    %cst_5 = arith.constant 0.000000e+00 : f32
    %8 = vector.broadcast %cst_5 : f32 to vector<8x128xf32>
    %9 = arith.cmpf oge, %7, %8 : vector<8x128xf32>
    %cst_6 = arith.constant 0.00999999977 : f32
    %10 = vector.broadcast %cst_6 : f32 to vector<8x128xf32>
    %11 = arith.mulf %10, %7 : vector<8x128xf32>
    %12 = arith.select %9, %7, %11 : vector<8x128xi1>, vector<8x128xf32>
    %13 = arith.truncf %12 : vector<8x128xf32> to vector<8x128xbf16>
    %c0_7 = arith.constant 0 : index
    %c0_8 = arith.constant 0 : index
    %c0_9 = arith.constant 0 : index
    %14 = vector.load %arg2[%c0_7, %c0_8, %c0_9] : memref<3x128x128xbf16, #tpu.memory_space<vmem>>, vector<1x128x128xbf16>
    %15 = vector.shape_cast %14 : vector<1x128x128xbf16> to vector<128x128xbf16>
    %cst_10 = arith.constant dense<0.000000e+00> : vector<8x128xf32>
    %16 = tpu.matmul %13, %15, %cst_10 {dimension_numbers = #tpu.dot_dimension_numbers<[1], [0], [0], [1], [0, 0, 1, 1], [], []>} : vector<8x128xbf16>, vector<128x128xbf16>, vector<8x128xf32> -> vector<8x128xf32>
    %17 = vector.extract_strided_slice %1 {offsets = [1, 0], sizes = [1, 128], strides = [1, 1]} : vector<4x128xf32> to vector<1x128xf32>
    %18 = vector.broadcast %17 : vector<1x128xf32> to vector<8x128xf32>
    %19 = arith.addf %16, %18 : vector<8x128xf32>
    %cst_11 = arith.constant 0.000000e+00 : f32
    %20 = vector.broadcast %cst_11 : f32 to vector<8x128xf32>
    %21 = arith.cmpf oge, %19, %20 : vector<8x128xf32>
    %cst_12 = arith.constant 0.00999999977 : f32
    %22 = vector.broadcast %cst_12 : f32 to vector<8x128xf32>
    %23 = arith.mulf %22, %19 : vector<8x128xf32>
    %24 = arith.select %21, %19, %23 : vector<8x128xi1>, vector<8x128xf32>
    %25 = arith.truncf %24 : vector<8x128xf32> to vector<8x128xbf16>
    %c1 = arith.constant 1 : index
    %c0_13 = arith.constant 0 : index
    %c0_14 = arith.constant 0 : index
    %26 = vector.load %arg2[%c1, %c0_13, %c0_14] : memref<3x128x128xbf16, #tpu.memory_space<vmem>>, vector<1x128x128xbf16>
    %27 = vector.shape_cast %26 : vector<1x128x128xbf16> to vector<128x128xbf16>
    %cst_15 = arith.constant dense<0.000000e+00> : vector<8x128xf32>
    %28 = tpu.matmul %25, %27, %cst_15 {dimension_numbers = #tpu.dot_dimension_numbers<[1], [0], [0], [1], [0, 0, 1, 1], [], []>} : vector<8x128xbf16>, vector<128x128xbf16>, vector<8x128xf32> -> vector<8x128xf32>
    %29 = vector.extract_strided_slice %1 {offsets = [2, 0], sizes = [1, 128], strides = [1, 1]} : vector<4x128xf32> to vector<1x128xf32>
    %30 = vector.broadcast %29 : vector<1x128xf32> to vector<8x128xf32>
    %31 = arith.addf %28, %30 : vector<8x128xf32>
    %cst_16 = arith.constant 0.000000e+00 : f32
    %32 = vector.broadcast %cst_16 : f32 to vector<8x128xf32>
    %33 = arith.cmpf oge, %31, %32 : vector<8x128xf32>
    %cst_17 = arith.constant 0.00999999977 : f32
    %34 = vector.broadcast %cst_17 : f32 to vector<8x128xf32>
    %35 = arith.mulf %34, %31 : vector<8x128xf32>
    %36 = arith.select %33, %31, %35 : vector<8x128xi1>, vector<8x128xf32>
    %37 = arith.truncf %36 : vector<8x128xf32> to vector<8x128xbf16>
    %c2 = arith.constant 2 : index
    %c0_18 = arith.constant 0 : index
    %c0_19 = arith.constant 0 : index
    %38 = vector.load %arg2[%c2, %c0_18, %c0_19] : memref<3x128x128xbf16, #tpu.memory_space<vmem>>, vector<1x128x128xbf16>
    %39 = vector.shape_cast %38 : vector<1x128x128xbf16> to vector<128x128xbf16>
    %cst_20 = arith.constant dense<0.000000e+00> : vector<8x128xf32>
    %40 = tpu.matmul %37, %39, %cst_20 {dimension_numbers = #tpu.dot_dimension_numbers<[1], [0], [0], [1], [0, 0, 1, 1], [], []>} : vector<8x128xbf16>, vector<128x128xbf16>, vector<8x128xf32> -> vector<8x128xf32>
    %41 = vector.extract_strided_slice %1 {offsets = [3, 0], sizes = [1, 128], strides = [1, 1]} : vector<4x128xf32> to vector<1x128xf32>
    %42 = vector.broadcast %41 : vector<1x128xf32> to vector<8x128xf32>
    %43 = arith.addf %40, %42 : vector<8x128xf32>
    %c0_21 = arith.constant 0 : index
    %c0_22 = arith.constant 0 : index
    %44 = vector.load %arg4[%c0_21, %c0_22] : memref<8x128xf32, #tpu.memory_space<vmem>>, vector<8x128xf32>
    tpu.vector_store %arg4[%c0_21, %c0_22], %43 {strides = array<i32>} : memref<8x128xf32, #tpu.memory_space<vmem>>, vector<8x128xf32>,
    return
  }
}

</mosaic_0001>

<llo_original>
// kernel: tpu_custom_call.1
$region0: #{tpu_custom_call.1}
  #allocation0 [shape = 'u32[]', space=smem, size = 0x4, offset = 0x4, fixed_abs, tag = 'smem constant byte address 0x4 - core index']
  #allocation1 [shape = 'u32[72,128]{1,0:T(1,128)}', space=vmem, size = 0x9000, scoped, tag = 'internal scratch']
  %s0 = inlined_call_operand.hbm [shape: f32[8,21], index: 0, kind: input, shape index: {}]
  %s1 = inlined_call_operand.hbm [shape: bf16[21,128], index: 1, kind: input, shape index: {}]
  %s2 = inlined_call_operand.hbm [shape: bf16[3,128,128], index: 2, kind: input, shape index: {}]
  %s3 = inlined_call_operand.hbm [shape: f32[4,128], index: 3, kind: input, shape index: {}]
  %s4 = inlined_call_operand.hbm [shape: f32[8,128], index: 4, kind: output, shape index: {}]
  %s5 = sld [smem:[#allocation0]]
  $region42: #{tpu_custom_call.1} parent=0
    _
  %s7 = ssub.s32 1, %s5
  %s8 = scalar_select 0, %s7, %s5
  $region1: #{tpu_custom_call.1} parent=0
    #allocation2 [shape = 'u8[4096]{0}', space=vmem, size = 0x1000, scoped, tag = 'input window, operand 0, single buffered']
    #allocation3 [shape = 's32[1]{0}', space=sflag, size = 0x4, scoped, tag = 'scoped memory for tpu_custom_call.1']
    #allocation4 [shape = 's32[1]{0}', space=sflag, size = 0x4, scoped, tag = 'scoped memory for tpu_custom_call.1']
    #allocation5 [shape = 'u8[6144]{0}', space=vmem, size = 0x1800, scoped, tag = 'input window, operand 1, single buffered']
    #allocation6 [shape = 's32[1]{0}', space=sflag, size = 0x4, scoped, tag = 'scoped memory for tpu_custom_call.1']
    #allocation7 [shape = 'u8[98304]{0}', space=vmem, size = 0x18000, scoped, tag = 'input window, operand 2, single buffered']
    #allocation8 [shape = 'u8[2048]{0}', space=vmem, size = 0x800, scoped, tag = 'input window, operand 3, single buffered']
    #allocation9 [shape = 's32[1]{0}', space=sflag, size = 0x4, scoped, tag = 'scoped memory for tpu_custom_call.1']
    #allocation10 [shape = 'u8[4096]{0}', space=vmem, size = 0x1000, scoped, tag = 'output window, operand 0, single buffered']
    %9 = vsyncpa [#allocation3], 0
    %10 = vsyncpa [#allocation6], 0
    %11 = vsyncpa [#allocation9], 0
    %12 = vsyncpa [#allocation4], 0
    // Predicated region
    $region2: #{tpu_custom_call.1} parent=1 // pred_check
      _
    $region3: #{tpu_custom_call.1} parent=1 // pred_check_branch
      %14 = sbr.rel (0) target = $region5
    $region4: #{tpu_custom_call.1} parent=1 // pred_region
      %16 = vsyncadd [#allocation3], 0
      %s18 = sshll.u32 %s0, 4
      %s19 = int_to_ptr.hbm [resolvable:$true] %s18
      %s20 = sshll.u32 [#allocation2], 4
      %s21 = int_to_ptr.vmem [resolvable:$true] %s20
      %23 = dma.hbm_to_vmem [thread:$0]  %s19, 128, %s21, [#allocation3]
    $region5: #{tpu_custom_call.1} parent=1 // pred_fallthru
      _
    // Predicated region
    $region6: #{tpu_custom_call.1} parent=1 // pred_check
      _
    $region7: #{tpu_custom_call.1} parent=1 // pred_check_branch
      %25 = sbr.rel (0) target = $region9
    $region8: #{tpu_custom_call.1} parent=1 // pred_region
      %27 = vsyncadd [#allocation6], 0
      %s28 = sshll.u32 %s1, 4
      %s29 = int_to_ptr.hbm [resolvable:$true] %s28
      %s30 = sshll.u32 [#allocation5], 4
      %s31 = int_to_ptr.vmem [resolvable:$true] %s30
      %36 = dma.hbm_to_vmem [thread:$0]  %s29, 192, %s31, [#allocation6], 64, 64, 4
    $region9: #{tpu_custom_call.1} parent=1 // pred_fallthru
      _
    // Predicated region
    $region10: #{tpu_custom_call.1} parent=1 // pred_check
      _
    $region11: #{tpu_custom_call.1} parent=1 // pred_check_branch
      %38 = sbr.rel (0) target = $region13
    $region12: #{tpu_custom_call.1} parent=1 // pred_region
      %40 = vsyncadd [#allocation6], 0
      %s41 = sshll.u32 %s2, 4
      %s42 = int_to_ptr.hbm [resolvable:$true] %s41
      %s43 = sshll.u32 [#allocation7], 4
      %s44 = int_to_ptr.vmem [resolvable:$true] %s43
      %49 = dma.hbm_to_vmem [thread:$0]  %s42, 3072, %s44, [#allocation6], 64, 64, 4
    $region13: #{tpu_custom_call.1} parent=1 // pred_fallthru
      _
    // Predicated region
    $region14: #{tpu_custom_call.1} parent=1 // pred_check
      _
    $region15: #{tpu_custom_call.1} parent=1 // pred_check_branch
      %51 = sbr.rel (0) target = $region17
    $region16: #{tpu_custom_call.1} parent=1 // pred_region
      %53 = vsyncadd [#allocation9], 0
      %s55 = sshll.u32 %s3, 4
      %s56 = int_to_ptr.hbm [resolvable:$true] %s55
      %s57 = sshll.u32 [#allocation8], 4
      %s58 = int_to_ptr.vmem [resolvable:$true] %s57
      %60 = dma.hbm_to_vmem [thread:$0]  %s56, 64, %s58, [#allocation9]
    $region17: #{tpu_custom_call.1} parent=1 // pred_fallthru
      _
    // Predicated region
    $region18: #{tpu_custom_call.1} parent=1 // pred_check
      _
    $region19: #{tpu_custom_call.1} parent=1 // pred_check_branch
      %62 = sbr.rel (0) target = $region21
    $region20: #{tpu_custom_call.1} parent=1 // pred_region
      %64 = dma.done [#allocation3], 128
    $region21: #{tpu_custom_call.1} parent=1 // pred_fallthru
      _
    // Predicated region
    $region22: #{tpu_custom_call.1} parent=1 // pred_check
      _
    $region23: #{tpu_custom_call.1} parent=1 // pred_check_branch
      %66 = sbr.rel (0) target = $region25
    $region24: #{tpu_custom_call.1} parent=1 // pred_region
      %68 = dma.done [#allocation6], 192
    $region25: #{tpu_custom_call.1} parent=1 // pred_fallthru
      _
    // Predicated region
    $region26: #{tpu_custom_call.1} parent=1 // pred_check
      _
    $region27: #{tpu_custom_call.1} parent=1 // pred_check_branch
      %70 = sbr.rel (0) target = $region29
    $region28: #{tpu_custom_call.1} parent=1 // pred_region
      %72 = dma.done [#allocation6], 3072
    $region29: #{tpu_custom_call.1} parent=1 // pred_fallthru
      _
    // Predicated region
    $region30: #{tpu_custom_call.1} parent=1 // pred_check
      _
    $region31: #{tpu_custom_call.1} parent=1 // pred_check_branch
      %74 = sbr.rel (0) target = $region33
    $region32: #{tpu_custom_call.1} parent=1 // pred_region
      %76 = dma.done [#allocation9], 64
    $region33: #{tpu_custom_call.1} parent=1 // pred_fallthru
      _
    %v78 = vld [vmem:[#allocation2] sm:$0xff]
    %v79 = vld [vmem:[#allocation8] sm:$0xf]
    %v80 = vpack.c.bf16 %v78, %v78
    %v81 = vld [vmem:[#allocation5] sm:$0xf]
    %v82 = vld [vmem:[#allocation5 + $0x4] sm:$0xf]
    %v83 = vld [vmem:[#allocation5 + $0x8] sm:$0x7]
    %v84 = vperm.slane %v79, 0
    %v88 = vunpack.c.l.b16 %v81
    %v89 = vunpack.c.l.b16 %v82
    %v90 = vunpack.c.l.b16 %v83
    %v91 = vpack.c.b16 %v89, %v88
    %v92 = vpack.c.b16 %v90, %v90
    %vm94 = vcmask 171008
    %v96 = vsel %vm94, %v80, 0
    %vm98 = vcmask 1041408
    %vm99 = vcmask 1042432
    %v100 = vsel %vm98, 4294967295, 65535
    %v101 = vsel %vm99, %v100, 0
    %v103 = vand.u32 %v92, %v101
    %105 = vmatpush.bf16.msra.mxu0 0
    %106 = vmatpush.bf16.msra.mxu0 0
    %107 = vmatpush.bf16.msra.mxu0 0
    %108 = vmatpush.bf16.msra.mxu0 0
    %109 = vmatpush.bf16.msra.mxu0 0
    %110 = vmatpush.bf16.msra.mxu0 0
    %111 = vmatpush.bf16.msra.mxu0 %v103
    %112 = vmatpush.bf16.msra.mxu0 %v91
    %113 = vmatmul.bf16.gmra.mxu0 %v96
    %v114 = vpop.f32.mrf.mxu0
    %v115 = vadd.f32 %v84, %v114
    %v116 = vpop.f32.mrf.mxu0
    %117 = vdwg.mxu0
    %vm118 = vcmp.ge.f32.partialorder %v115, 0.0
    %v119 = vmul.f32 %v115, 0.01
    %v120 = vsel %vm118, %v115, %v119
    %v121 = vpack.c.bf16 %v120, %v120
    %v122 = vld [vmem:[#allocation7] sm:$0xf]
    %v123 = vld [vmem:[#allocation7 + $0x4] sm:$0xf]
    %v124 = vld [vmem:[#allocation7 + $0x8] sm:$0xf]
    %v125 = vld [vmem:[#allocation7 + $0xc] sm:$0xf]
    %v126 = vld [vmem:[#allocation7 + $0x10] sm:$0xf]
    %v127 = vld [vmem:[#allocation7 + $0x14] sm:$0xf]
    %v128 = vld [vmem:[#allocation7 + $0x18] sm:$0xf]
    %v129 = vld [vmem:[#allocation7 + $0x1c] sm:$0xf]
    %v130 = vld [vmem:[#allocation7 + $0x20] sm:$0xf]
    %v131 = vld [vmem:[#allocation7 + $0x24] sm:$0xf]
    %v132 = vld [vmem:[#allocation7 + $0x28] sm:$0xf]
    %v133 = vld [vmem:[#allocation7 + $0x2c] sm:$0xf]
    %v134 = vld [vmem:[#allocation7 + $0x30] sm:$0xf]
    %v135 = vld [vmem:[#allocation7 + $0x34] sm:$0xf]
    %v136 = vld [vmem:[#allocation7 + $0x38] sm:$0xf]
    %v137 = vld [vmem:[#allocation7 + $0x3c] sm:$0xf]
    %v138 = vperm.slane %v79, 1
    %v155 = vunpack.c.l.b16 %v122
    %v156 = vunpack.c.l.b16 %v123
    %v157 = vunpack.c.l.b16 %v124
    %v158 = vunpack.c.l.b16 %v125
    %v159 = vunpack.c.l.b16 %v126
    %v160 = vunpack.c.l.b16 %v127
    %v161 = vunpack.c.l.b16 %v128
    %v162 = vunpack.c.l.b16 %v129
    %v163 = vunpack.c.l.b16 %v130
    %v164 = vunpack.c.l.b16 %v131
    %v165 = vunpack.c.l.b16 %v132
    %v166 = vunpack.c.l.b16 %v133
    %v167 = vunpack.c.l.b16 %v134
    %v168 = vunpack.c.l.b16 %v135
    %v169 = vunpack.c.l.b16 %v136
    %v170 = vunpack.c.l.b16 %v137
    %v171 = vpack.c.b16 %v156, %v155
    %v172 = vpack.c.b16 %v158, %v157
    %v173 = vpack.c.b16 %v160, %v159
    %v174 = vpack.c.b16 %v162, %v161
    %v175 = vpack.c.b16 %v164, %v163
    %v176 = vpack.c.b16 %v166, %v165
    %v177 = vpack.c.b16 %v168, %v167
    %v178 = vpack.c.b16 %v170, %v169
    %187 = vmatpush.bf16.msra.mxu0 %v178
    %188 = vmatpush.bf16.msra.mxu0 %v177
    %189 = vmatpush.bf16.msra.mxu0 %v176
    %190 = vmatpush.bf16.msra.mxu0 %v175
    %191 = vmatpush.bf16.msra.mxu0 %v174
    %192 = vmatpush.bf16.msra.mxu0 %v173
    %193 = vmatpush.bf16.msra.mxu0 %v172
    %194 = vmatpush.bf16.msra.mxu0 %v171
    %195 = vmatmul.bf16.gmra.mxu0 %v121
    %v196 = vpop.f32.mrf.mxu0
    %v197 = vadd.f32 %v138, %v196
    %v198 = vpop.f32.mrf.mxu0
    %199 = vdwg.mxu0
    %vm200 = vcmp.ge.f32.partialorder %v197, 0.0
    %v201 = vmul.f32 %v197, 0.01
    %v202 = vsel %vm200, %v197, %v201
    %v203 = vpack.c.bf16 %v202, %v202
    %s204 = scalar_lea.vmem [#allocation7], 64
    %v205 = vld [vmem:[%s204] sm:$0xf]
    %v206 = vld [vmem:[%s204 + $0x4] sm:$0xf]
    %v207 = vld [vmem:[%s204 + $0x8] sm:$0xf]
    %v208 = vld [vmem:[%s204 + $0xc] sm:$0xf]
    %v209 = vld [vmem:[%s204 + $0x10] sm:$0xf]
    %v210 = vld [vmem:[%s204 + $0x14] sm:$0xf]
    %v211 = vld [vmem:[%s204 + $0x18] sm:$0xf]
    %v212 = vld [vmem:[%s204 + $0x1c] sm:$0xf]
    %v213 = vld [vmem:[%s204 + $0x20] sm:$0xf]
    %v214 = vld [vmem:[%s204 + $0x24] sm:$0xf]
    %v215 = vld [vmem:[%s204 + $0x28] sm:$0xf]
    %v216 = vld [vmem:[%s204 + $0x2c] sm:$0xf]
    %v217 = vld [vmem:[%s204 + $0x30] sm:$0xf]
    %v218 = vld [vmem:[%s204 + $0x34] sm:$0xf]
    %v219 = vld [vmem:[%s204 + $0x38] sm:$0xf]
    %v220 = vld [vmem:[%s204 + $0x3c] sm:$0xf]
    %v221 = vperm.slane %v79, 2
    %v238 = vunpack.c.l.b16 %v205
    %v239 = vunpack.c.l.b16 %v206
    %v240 = vunpack.c.l.b16 %v207
    %v241 = vunpack.c.l.b16 %v208
    %v242 = vunpack.c.l.b16 %v209
    %v243 = vunpack.c.l.b16 %v210
    %v244 = vunpack.c.l.b16 %v211
    %v245 = vunpack.c.l.b16 %v212
    %v246 = vunpack.c.l.b16 %v213
    %v247 = vunpack.c.l.b16 %v214
    %v248 = vunpack.c.l.b16 %v215
    %v249 = vunpack.c.l.b16 %v216
    %v250 = vunpack.c.l.b16 %v217
    %v251 = vunpack.c.l.b16 %v218
    %v252 = vunpack.c.l.b16 %v219
    %v253 = vunpack.c.l.b16 %v220
    %v254 = vpack.c.b16 %v239, %v238
    %v255 = vpack.c.b16 %v241, %v240
    %v256 = vpack.c.b16 %v243, %v242
    %v257 = vpack.c.b16 %v245, %v244
    %v258 = vpack.c.b16 %v247, %v246
    %v259 = vpack.c.b16 %v249, %v248
    %v260 = vpack.c.b16 %v251, %v250
    %v261 = vpack.c.b16 %v253, %v252
    %270 = vmatpush.bf16.msra.mxu0 %v261
    %271 = vmatpush.bf16.msra.mxu0 %v260
    %272 = vmatpush.bf16.msra.mxu0 %v259
    %273 = vmatpush.bf16.msra.mxu0 %v258
    %274 = vmatpush.bf16.msra.mxu0 %v257
    %275 = vmatpush.bf16.msra.mxu0 %v256
    %276 = vmatpush.bf16.msra.mxu0 %v255
    %277 = vmatpush.bf16.msra.mxu0 %v254
    %278 = vmatmul.bf16.gmra.mxu0 %v203
    %v279 = vpop.f32.mrf.mxu0
    %v280 = vadd.f32 %v221, %v279
    %v281 = vpop.f32.mrf.mxu0
    %282 = vdwg.mxu0
    %vm283 = vcmp.ge.f32.partialorder %v280, 0.0
    %v284 = vmul.f32 %v280, 0.01
    %v285 = vsel %vm283, %v280, %v284
    %v286 = vpack.c.bf16 %v285, %v285
    %s287 = scalar_lea.vmem [#allocation7], 128
    %v288 = vld [vmem:[%s287] sm:$0xf]
    %v289 = vld [vmem:[%s287 + $0x4] sm:$0xf]
    %v290 = vld [vmem:[%s287 + $0x8] sm:$0xf]
    %v291 = vld [vmem:[%s287 + $0xc] sm:$0xf]
    %v292 = vld [vmem:[%s287 + $0x10] sm:$0xf]
    %v293 = vld [vmem:[%s287 + $0x14] sm:$0xf]
    %v294 = vld [vmem:[%s287 + $0x18] sm:$0xf]
    %v295 = vld [vmem:[%s287 + $0x1c] sm:$0xf]
    %v296 = vld [vmem:[%s287 + $0x20] sm:$0xf]
    %v297 = vld [vmem:[%s287 + $0x24] sm:$0xf]
    %v298 = vld [vmem:[%s287 + $0x28] sm:$0xf]
    %v299 = vld [vmem:[%s287 + $0x2c] sm:$0xf]
    %v300 = vld [vmem:[%s287 + $0x30] sm:$0xf]
    %v301 = vld [vmem:[%s287 + $0x34] sm:$0xf]
    %v302 = vld [vmem:[%s287 + $0x38] sm:$0xf]
    %v303 = vld [vmem:[%s287 + $0x3c] sm:$0xf]
    %v304 = vperm.slane %v79, 3
    %v321 = vunpack.c.l.b16 %v288
    %v322 = vunpack.c.l.b16 %v289
    %v323 = vunpack.c.l.b16 %v290
    %v324 = vunpack.c.l.b16 %v291
    %v325 = vunpack.c.l.b16 %v292
    %v326 = vunpack.c.l.b16 %v293
    %v327 = vunpack.c.l.b16 %v294
    %v328 = vunpack.c.l.b16 %v295
    %v329 = vunpack.c.l.b16 %v296
    %v330 = vunpack.c.l.b16 %v297
    %v331 = vunpack.c.l.b16 %v298
    %v332 = vunpack.c.l.b16 %v299
    %v333 = vunpack.c.l.b16 %v300
    %v334 = vunpack.c.l.b16 %v301
    %v335 = vunpack.c.l.b16 %v302
    %v336 = vunpack.c.l.b16 %v303
    %v337 = vpack.c.b16 %v322, %v321
    %v338 = vpack.c.b16 %v324, %v323
    %v339 = vpack.c.b16 %v326, %v325
    %v340 = vpack.c.b16 %v328, %v327
    %v341 = vpack.c.b16 %v330, %v329
    %v342 = vpack.c.b16 %v332, %v331
    %v343 = vpack.c.b16 %v334, %v333
    %v344 = vpack.c.b16 %v336, %v335
    %353 = vmatpush.bf16.msra.mxu0 %v344
    %354 = vmatpush.bf16.msra.mxu0 %v343
    %355 = vmatpush.bf16.msra.mxu0 %v342
    %356 = vmatpush.bf16.msra.mxu0 %v341
    %357 = vmatpush.bf16.msra.mxu0 %v340
    %358 = vmatpush.bf16.msra.mxu0 %v339
    %359 = vmatpush.bf16.msra.mxu0 %v338
    %360 = vmatpush.bf16.msra.mxu0 %v337
    %361 = vmatmul.bf16.gmra.mxu0 %v286
    %v362 = vpop.f32.mrf.mxu0
    %v363 = vadd.f32 %v304, %v362
    %v364 = vpop.f32.mrf.mxu0
    %365 = vdwg.mxu0
    %366 = vst [vmem:[#allocation10] sm:$0xff] %v363
    // Predicated region
    $region34: #{tpu_custom_call.1} parent=1 // pred_check
      _
    $region35: #{tpu_custom_call.1} parent=1 // pred_check_branch
      %368 = sbr.rel (0) target = $region37
    $region36: #{tpu_custom_call.1} parent=1 // pred_region
      %370 = vsyncadd [#allocation4], 0
      %s372 = sshll.u32 [#allocation10], 4
      %s373 = int_to_ptr.vmem [resolvable:$true] %s372
      %s374 = sshll.u32 %s4, 4
      %s375 = int_to_ptr.hbm [resolvable:$true] %s374
      %377 = dma.vmem_to_hbm [thread:$0]  %s373, 128, %s375, [#allocation4]
    $region37: #{tpu_custom_call.1} parent=1 // pred_fallthru
      _
    // Predicated region
    $region38: #{tpu_custom_call.1} parent=1 // pred_check
      _
    $region39: #{tpu_custom_call.1} parent=1 // pred_check_branch
      %379 = sbr.rel (0) target = $region41
    $region40: #{tpu_custom_call.1} parent=1 // pred_region
      %381 = dma.done [#allocation4], 128
    $region41: #{tpu_custom_call.1} parent=1 // pred_fallthru
      _
    %382 = vsyncpa [#allocation3], 1
    %383 = vsyncpa [#allocation6], 1
    %384 = vsyncpa [#allocation9], 1
    %385 = vsyncpa [#allocation4], 1

</llo_original>
